<compile_context>
chip_gen: v5e
topology: v5e:2x2
jax: 0.10.0
libtpu: 0.0.40
codegen_flags: <defaults>
</compile_context>

<pallas_src>
import functools

import jax
import jax.numpy as jnp
import numpy as np
from jax.experimental import pallas as pl
from jax.experimental.pallas import tpu as pltpu

IMG_DIM = 28 * 28      # 784
NUM_HIDDEN = 128
BN_EPS = 1e-5
LRELU_SLOPE = 0.2


def _discriminator_kernel(x_ref, w1_ref, gamma_ref, beta_ref, w2t_ref, b2_ref,
                          o_ref,
                          h_buf, sum_ref, sumsq_ref, scale_ref, shift_ref,
                          *, inv_n):
    p = pl.program_id(0)           # 0 = stats pass, 1 = output pass
    t = pl.program_id(1)           # batch tile index
    nt = pl.num_programs(1)

    # ---------------- Pass 0: h = x @ W1, accumulate BN statistics ----------------
    @pl.when(p == 0)
    def _pass0():
        @pl.when(t == 0)
        def _init():
            sum_ref[...] = jnp.zeros_like(sum_ref)
            sumsq_ref[...] = jnp.zeros_like(sumsq_ref)

        # Linear-1 bias omitted: cancelled exactly by the BN mean subtraction.
        h = jnp.dot(x_ref[...], w1_ref[...], preferred_element_type=jnp.float32)
        h_buf[t] = h                                        # persist in VMEM scratch
        sum_ref[...] += jnp.sum(h, axis=0, keepdims=True)
        sumsq_ref[...] += jnp.sum(h * h, axis=0, keepdims=True)

        @pl.when(t == nt - 1)
        def _finalize():
            mean = sum_ref[...] * inv_n
            var = sumsq_ref[...] * inv_n - mean * mean      # biased batch variance
            inv_std = jax.lax.rsqrt(var + BN_EPS)
            scale = gamma_ref[...] * inv_std                # fold gamma once
            scale_ref[...] = scale
            shift_ref[...] = beta_ref[...] - mean * scale

    # -------- Pass 1: BN affine + LeakyReLU + Linear-2 (VPU+XLU) + Sigmoid --------
    @pl.when(p == 1)
    def _pass1():
        h = h_buf[t] * scale_ref[...] + shift_ref[...]
        h = jnp.maximum(h, LRELU_SLOPE * h)                 # LeakyReLU(0.2), 1 VALU op
        # (tb,128)@(128,1) wastes the MXU; broadcast-mul + lane reduce instead.
        logits = jnp.sum(h * w2t_ref[...], axis=1, keepdims=True) + b2_ref[0]
        o_ref[...] = 1.0 / (1.0 + jnp.exp(-logits))         # exact sigmoid (f32)


def _pick_tile(batch):
    for tb in (1024, 512, 256, 128, 64, 32, 16, 8):
        if batch % tb == 0:
            return tb
    return batch   # batch not a multiple of 8 -> single full-batch tile


def discriminator_forward(x, params, *, tile_batch=None):
    w1, b1, gamma, beta, w2, b2 = params
    del b1   # mathematically cancelled by train-mode BatchNorm (and zero-initialized)
    B, D = x.shape
    H = w1.shape[1]

    tb = _pick_tile(B) if tile_batch is None else int(tile_batch)
    if not (tb == B or (B % tb == 0 and tb % 8 == 0)):
        raise ValueError(f"tile_batch={tb} must divide B={B} and be a multiple of 8")
    n_tiles = B // tb

    # Persistent h scratch must fit VMEM alongside the x double-buffer (v7x: 64 MiB).
    if B * H * 4 > 48 * 1024 * 1024:
        raise ValueError("batch too large for in-VMEM h scratch; shard the batch outside")

    w2t = w2.reshape(1, H)             # (1, H) row for the VPU second "matmul"
    b2s = b2.reshape(-1)               # scalar -> SMEM

    kernel = functools.partial(_discriminator_kernel, inv_n=1.0 / B)

    vmem_need = (B * H * 4              # h_buf scratch (persists across grid)
                 + 2 * tb * D * 4       # double-buffered x tiles
                 + D * H * 4            # resident W1
                 + 8 * H * 4            # stats / scale / shift / gamma / beta / w2 row
                 + 4 * tb * 4)          # output tiles
    vmem_limit = int(min(100 * 1024 * 1024, max(32 * 1024 * 1024, 2 * vmem_need)))

    return pl.pallas_call(
        kernel,
        out_shape=jax.ShapeDtypeStruct((B, 1), jnp.float32),
        grid=(2, n_tiles),                                    # (pass, batch tile)
        in_specs=[
            # x: streamed per tile in pass 0; pinned to tile 0 (no re-read) in pass 1.
            pl.BlockSpec((tb, D), lambda p, t: (t * (1 - p), 0)),
            pl.BlockSpec((D, H), lambda p, t: (0, 0)),        # W1, resident
            pl.BlockSpec((1, H), lambda p, t: (0, 0)),        # gamma
            pl.BlockSpec((1, H), lambda p, t: (0, 0)),        # beta
            pl.BlockSpec((1, H), lambda p, t: (0, 0)),        # w2 row
            pl.BlockSpec(memory_space=pltpu.MemorySpace.SMEM),  # b2 scalar
        ],
        # Output only written in pass 1; index pinned to block 0 during pass 0 so no
        # garbage writeback ever reaches HBM.
        out_specs=pl.BlockSpec((tb, 1), lambda p, t: (t * p, 0)),
        scratch_shapes=[
            pltpu.VMEM((n_tiles, tb, H), jnp.float32),        # h_buf
            pltpu.VMEM((1, H), jnp.float32),                  # sum
            pltpu.VMEM((1, H), jnp.float32),                  # sum of squares
            pltpu.VMEM((1, H), jnp.float32),                  # scale = gamma * inv_std
            pltpu.VMEM((1, H), jnp.float32),                  # shift = beta - mean*scale
        ],
        compiler_params=pltpu.CompilerParams(
            dimension_semantics=("arbitrary", "arbitrary"),   # BN couples tiles; keep sequential
            vmem_limit_bytes=vmem_limit),
        cost_estimate=pl.CostEstimate(
            flops=2 * B * D * H + 8 * B * H,
            transcendentals=B + H,
            bytes_accessed=B * D * 4 + D * H * 4 + B * 4 + 4 * H * 4),
    )(x, w1, gamma, beta, w2t, b2s)


def init_params(key):
    # Xavier-uniform for both Linear layers (as in xavier_init), zero bias.
    k1, k2 = jax.random.split(key)
    lim1 = float(np.sqrt(6.0 / (IMG_DIM + NUM_HIDDEN)))
    w1 = jax.random.uniform(k1, (IMG_DIM, NUM_HIDDEN), jnp.float32, -lim1, lim1)
    b1 = jnp.zeros((1, NUM_HIDDEN), jnp.float32)
    # BatchNorm1d affine params: gamma=1, beta=0 (PyTorch defaults).
    gamma = jnp.ones((1, NUM_HIDDEN), jnp.float32)
    beta = jnp.zeros((1, NUM_HIDDEN), jnp.float32)
    lim2 = float(np.sqrt(6.0 / (NUM_HIDDEN + 1)))
    w2 = jax.random.uniform(k2, (NUM_HIDDEN, 1), jnp.float32, -lim2, lim2)
    b2 = jnp.zeros((1, 1), jnp.float32)
    return (w1, b1, gamma, beta, w2, b2)


def reference_forward(x, params):
    w1, b1, gamma, beta, w2, b2 = params
    h = x @ w1 + b1
    mean = h.mean(axis=0, keepdims=True)
    var = ((h - mean) ** 2).mean(axis=0, keepdims=True)     # biased (train mode)
    h = (h - mean) / jnp.sqrt(var + BN_EPS) * gamma + beta
    h = jnp.where(h >= 0, h, LRELU_SLOPE * h)
    return jax.nn.sigmoid(h @ w2 + b2)


if __name__ == "__main__":
    key = jax.random.PRNGKey(0)
    pkey, xkey = jax.random.split(key)
    params = init_params(pkey)

    B = 256   # small demo batch; tile_batch=64 -> grid (2, 4) exercises tiled BN stats
    x = jax.random.normal(xkey, (B, IMG_DIM), jnp.float32)

    out = discriminator_forward(x, params, tile_batch=64)
    out = jax.block_until_ready(out)

    ref = reference_forward(x, params)
    np.testing.assert_allclose(np.asarray(out), np.asarray(ref), rtol=1e-4, atol=1e-5)
    assert out.shape == (B, 1)
    print("KERNEL_OK")
</pallas_src>

<mosaic_0001>
module attributes {stable_mosaic.version = 11 : i64} {
  func.func @_discriminator_kernel(%arg0: i32, %arg1: i32, %arg2: memref<64x784xf32, #tpu.memory_space<vmem>>, %arg3: memref<784x128xf32, #tpu.memory_space<vmem>>, %arg4: memref<1x128xf32, #tpu.memory_space<vmem>>, %arg5: memref<1x128xf32, #tpu.memory_space<vmem>>, %arg6: memref<1x128xf32, #tpu.memory_space<vmem>>, %arg7: memref<1xf32, #tpu.memory_space<smem>>, %arg8: memref<64x1xf32, #tpu.memory_space<vmem>>, %arg9: memref<4x64x128xf32, #tpu.memory_space<vmem>>, %arg10: memref<1x128xf32, #tpu.memory_space<vmem>>, %arg11: memref<1x128xf32, #tpu.memory_space<vmem>>, %arg12: memref<1x128xf32, #tpu.memory_space<vmem>>, %arg13: memref<1x128xf32, #tpu.memory_space<vmem>>) attributes {dimension_semantics = [#tpu.dimension_semantics<arbitrary>, #tpu.dimension_semantics<arbitrary>], iteration_bounds = array<i64: 2, 4>, scalar_prefetch = 0 : i64, scratch_operands = 5 : i64, tpu.core_type = #tpu.core_type<tc>, window_params = [{transform_indices = @transform_0, window_bounds = array<i64: 64, 784>}, {pipeline_mode = #tpu.pipeline_mode<synchronous>, transform_indices = @transform_1, window_bounds = array<i64: 784, 128>}, {pipeline_mode = #tpu.pipeline_mode<synchronous>, transform_indices = @transform_2, window_bounds = array<i64: 1, 128>}, {pipeline_mode = #tpu.pipeline_mode<synchronous>, transform_indices = @transform_3, window_bounds = array<i64: 1, 128>}, {pipeline_mode = #tpu.pipeline_mode<synchronous>, transform_indices = @transform_4, window_bounds = array<i64: 1, 128>}, {transform_indices = @transform_5, window_bounds = array<i64: 1>}, {transform_indices = @transform_6, window_bounds = array<i64: 64, 1>}]} {
    %c0_i32 = arith.constant 0 : i32
    %0 = arith.cmpi eq, %arg0, %c0_i32 : i32
    %1 = arith.extui %0 : i1 to i32
    %c0_i32_0 = arith.constant 0 : i32
    %2 = arith.cmpi ne, %1, %c0_i32_0 : i32
    scf.if %2 {
      %c0_i32_2 = arith.constant 0 : i32
      %6 = arith.cmpi eq, %arg1, %c0_i32_2 : i32
      %7 = arith.extui %6 : i1 to i32
      %c0_i32_3 = arith.constant 0 : i32
      %8 = arith.cmpi ne, %7, %c0_i32_3 : i32
      scf.if %8 {
        %cst_20 = arith.constant 0.000000e+00 : f32
        %30 = vector.broadcast %cst_20 : f32 to vector<1x128xf32>
        %c0_21 = arith.constant 0 : index
        %c0_22 = arith.constant 0 : index
        %31 = vector.load %arg10[%c0_21, %c0_22] : memref<1x128xf32, #tpu.memory_space<vmem>>, vector<1x128xf32>
        tpu.vector_store %arg10[%c0_21, %c0_22], %30 {strides = array<i32>} : memref<1x128xf32, #tpu.memory_space<vmem>>, vector<1x128xf32>,
        %cst_23 = arith.constant 0.000000e+00 : f32
        %32 = vector.broadcast %cst_23 : f32 to vector<1x128xf32>
        %c0_24 = arith.constant 0 : index
        %c0_25 = arith.constant 0 : index
        %33 = vector.load %arg11[%c0_24, %c0_25] : memref<1x128xf32, #tpu.memory_space<vmem>>, vector<1x128xf32>
        tpu.vector_store %arg11[%c0_24, %c0_25], %32 {strides = array<i32>} : memref<1x128xf32, #tpu.memory_space<vmem>>, vector<1x128xf32>,
      } else {
      }
      %c0 = arith.constant 0 : index
      %c0_4 = arith.constant 0 : index
      %9 = vector.load %arg2[%c0, %c0_4] : memref<64x784xf32, #tpu.memory_space<vmem>>, vector<64x784xf32>
      %c0_5 = arith.constant 0 : index
      %c0_6 = arith.constant 0 : index
      %10 = vector.load %arg3[%c0_5, %c0_6] : memref<784x128xf32, #tpu.memory_space<vmem>>, vector<784x128xf32>
      %cst = arith.constant dense<0.000000e+00> : vector<64x128xf32>
      %11 = tpu.matmul %9, %10, %cst {dimension_numbers = #tpu.dot_dimension_numbers<[1], [0], [0], [1], [0, 0, 1, 1], [], []>} : vector<64x784xf32>, vector<784x128xf32>, vector<64x128xf32> -> vector<64x128xf32>
      %12 = arith.index_cast %arg1 : i32 to index
      %c0_7 = arith.constant 0 : index
      %c0_8 = arith.constant 0 : index
      %13 = vector.load %arg9[%12, %c0_7, %c0_8] : memref<4x64x128xf32, #tpu.memory_space<vmem>>, vector<1x64x128xf32>
      %14 = vector.shape_cast %13 : vector<1x64x128xf32> to vector<64x128xf32>
      %15 = vector.shape_cast %11 : vector<64x128xf32> to vector<1x64x128xf32>
      tpu.vector_store %arg9[%12, %c0_7, %c0_8], %15 {strides = array<i32>} : memref<4x64x128xf32, #tpu.memory_space<vmem>>, vector<1x64x128xf32>,
      %c0_9 = arith.constant 0 : index
      %c0_10 = arith.constant 0 : index
      %16 = vector.load %arg10[%c0_9, %c0_10] : memref<1x128xf32, #tpu.memory_space<vmem>>, vector<1x128xf32>
      %cst_11 = arith.constant dense<0.000000e+00> : vector<128xf32>
      %17 = vector.multi_reduction <add>, %11, %cst_11 [0] : vector<64x128xf32> to vector<128xf32>
      %18 = vector.shape_cast %17 : vector<128xf32> to vector<1x128xf32>
      %19 = arith.addf %16, %18 : vector<1x128xf32>
      %c0_12 = arith.constant 0 : index
      %c0_13 = arith.constant 0 : index
      %20 = vector.load %arg10[%c0_12, %c0_13] : memref<1x128xf32, #tpu.memory_space<vmem>>, vector<1x128xf32>
      tpu.vector_store %arg10[%c0_12, %c0_13], %19 {strides = array<i32>} : memref<1x128xf32, #tpu.memory_space<vmem>>, vector<1x128xf32>,
      %c0_14 = arith.constant 0 : index
      %c0_15 = arith.constant 0 : index
      %21 = vector.load %arg11[%c0_14, %c0_15] : memref<1x128xf32, #tpu.memory_space<vmem>>, vector<1x128xf32>
      %22 = arith.mulf %11, %11 : vector<64x128xf32>
      %cst_16 = arith.constant dense<0.000000e+00> : vector<128xf32>
      %23 = vector.multi_reduction <add>, %22, %cst_16 [0] : vector<64x128xf32> to vector<128xf32>
      %24 = vector.shape_cast %23 : vector<128xf32> to vector<1x128xf32>
      %25 = arith.addf %21, %24 : vector<1x128xf32>
      %c0_17 = arith.constant 0 : index
      %c0_18 = arith.constant 0 : index
      %26 = vector.load %arg11[%c0_17, %c0_18] : memref<1x128xf32, #tpu.memory_space<vmem>>, vector<1x128xf32>
      tpu.vector_store %arg11[%c0_17, %c0_18], %25 {strides = array<i32>} : memref<1x128xf32, #tpu.memory_space<vmem>>, vector<1x128xf32>,
      %c3_i32 = arith.constant 3 : i32
      %27 = arith.cmpi eq, %arg1, %c3_i32 : i32
      %28 = arith.extui %27 : i1 to i32
      %c0_i32_19 = arith.constant 0 : i32
      %29 = arith.cmpi ne, %28, %c0_i32_19 : i32
      scf.if %29 {
        %c0_20 = arith.constant 0 : index
        %c0_21 = arith.constant 0 : index
        %30 = vector.load %arg10[%c0_20, %c0_21] : memref<1x128xf32, #tpu.memory_space<vmem>>, vector<1x128xf32>
        %cst_22 = arith.constant 3.906250e-03 : f32
        %31 = vector.broadcast %cst_22 : f32 to vector<1x128xf32>
        %32 = arith.mulf %30, %31 : vector<1x128xf32>
        %c0_23 = arith.constant 0 : index
        %c0_24 = arith.constant 0 : index
        %33 = vector.load %arg11[%c0_23, %c0_24] : memref<1x128xf32, #tpu.memory_space<vmem>>, vector<1x128xf32>
        %cst_25 = arith.constant 3.906250e-03 : f32
        %34 = vector.broadcast %cst_25 : f32 to vector<1x128xf32>
        %35 = arith.mulf %33, %34 : vector<1x128xf32>
        %36 = arith.mulf %32, %32 : vector<1x128xf32>
        %37 = arith.subf %35, %36 : vector<1x128xf32>
        %cst_26 = arith.constant 9.99999974E-6 : f32
        %38 = vector.broadcast %cst_26 : f32 to vector<1x128xf32>
        %39 = arith.addf %37, %38 : vector<1x128xf32>
        %40 = math.rsqrt %39 : vector<1x128xf32>
        %c0_27 = arith.constant 0 : index
        %c0_28 = arith.constant 0 : index
        %41 = vector.load %arg4[%c0_27, %c0_28] : memref<1x128xf32, #tpu.memory_space<vmem>>, vector<1x128xf32>
        %42 = arith.mulf %41, %40 : vector<1x128xf32>
        %c0_29 = arith.constant 0 : index
        %c0_30 = arith.constant 0 : index
        %43 = vector.load %arg12[%c0_29, %c0_30] : memref<1x128xf32, #tpu.memory_space<vmem>>, vector<1x128xf32>
        tpu.vector_store %arg12[%c0_29, %c0_30], %42 {strides = array<i32>} : memref<1x128xf32, #tpu.memory_space<vmem>>, vector<1x128xf32>,
        %c0_31 = arith.constant 0 : index
        %c0_32 = arith.constant 0 : index
        %44 = vector.load %arg5[%c0_31, %c0_32] : memref<1x128xf32, #tpu.memory_space<vmem>>, vector<1x128xf32>
        %45 = arith.mulf %32, %42 : vector<1x128xf32>
        %46 = arith.subf %44, %45 : vector<1x128xf32>
        %c0_33 = arith.constant 0 : index
        %c0_34 = arith.constant 0 : index
        %47 = vector.load %arg13[%c0_33, %c0_34] : memref<1x128xf32, #tpu.memory_space<vmem>>, vector<1x128xf32>
        tpu.vector_store %arg13[%c0_33, %c0_34], %46 {strides = array<i32>} : memref<1x128xf32, #tpu.memory_space<vmem>>, vector<1x128xf32>,
      } else {
      }
    } else {
    }
    %c1_i32 = arith.constant 1 : i32
    %3 = arith.cmpi eq, %arg0, %c1_i32 : i32
    %4 = arith.extui %3 : i1 to i32
    %c0_i32_1 = arith.constant 0 : i32
    %5 = arith.cmpi ne, %4, %c0_i32_1 : i32
    scf.if %5 {
      %6 = arith.index_cast %arg1 : i32 to index
      %c0 = arith.constant 0 : index
      %c0_2 = arith.constant 0 : index
      %7 = vector.load %arg9[%6, %c0, %c0_2] : memref<4x64x128xf32, #tpu.memory_space<vmem>>, vector<1x64x128xf32>
      %8 = vector.shape_cast %7 : vector<1x64x128xf32> to vector<64x128xf32>
      %c0_3 = arith.constant 0 : index
      %c0_4 = arith.constant 0 : index
      %9 = vector.load %arg12[%c0_3, %c0_4] : memref<1x128xf32, #tpu.memory_space<vmem>>, vector<1x128xf32>
      %10 = vector.broadcast %9 : vector<1x128xf32> to vector<64x128xf32>
      %11 = arith.mulf %8, %10 : vector<64x128xf32>
      %c0_5 = arith.constant 0 : index
      %c0_6 = arith.constant 0 : index
      %12 = vector.load %arg13[%c0_5, %c0_6] : memref<1x128xf32, #tpu.memory_space<vmem>>, vector<1x128xf32>
      %13 = vector.broadcast %12 : vector<1x128xf32> to vector<64x128xf32>
      %14 = arith.addf %11, %13 : vector<64x128xf32>
      %cst = arith.constant 2.000000e-01 : f32
      %15 = vector.broadcast %cst : f32 to vector<64x128xf32>
      %16 = arith.mulf %15, %14 : vector<64x128xf32>
      %17 = arith.maximumf %14, %16 : vector<64x128xf32>
      %c0_7 = arith.constant 0 : index
      %c0_8 = arith.constant 0 : index
      %18 = vector.load %arg6[%c0_7, %c0_8] : memref<1x128xf32, #tpu.memory_space<vmem>>, vector<1x128xf32>
      %19 = vector.broadcast %18 : vector<1x128xf32> to vector<64x128xf32>
      %20 = arith.mulf %17, %19 : vector<64x128xf32>
      %cst_9 = arith.constant dense<0.000000e+00> : vector<64xf32>
      %21 = vector.multi_reduction <add>, %20, %cst_9 [1] : vector<64x128xf32> to vector<64xf32>
      %22 = vector.shape_cast %21 : vector<64xf32> to vector<64x1xf32>
      %c0_10 = arith.constant 0 : index
      %23 = memref.load %arg7[%c0_10] : memref<1xf32, #tpu.memory_space<smem>>
      %24 = vector.broadcast %23 : f32 to vector<64x1xf32>
      %25 = arith.addf %22, %24 : vector<64x1xf32>
      %cst_11 = arith.constant 0.000000e+00 : f32
      %26 = vector.broadcast %cst_11 : f32 to vector<64x1xf32>
      %27 = arith.subf %26, %25 : vector<64x1xf32>
      %28 = math.exp %27 : vector<64x1xf32>
      %cst_12 = arith.constant 1.000000e+00 : f32
      %29 = vector.broadcast %cst_12 : f32 to vector<64x1xf32>
      %30 = arith.addf %29, %28 : vector<64x1xf32>
      %cst_13 = arith.constant 1.000000e+00 : f32
      %31 = vector.broadcast %cst_13 : f32 to vector<64x1xf32>
      %32 = arith.divf %31, %30 : vector<64x1xf32>
      %c0_14 = arith.constant 0 : index
      %c0_15 = arith.constant 0 : index
      %33 = vector.load %arg8[%c0_14, %c0_15] : memref<64x1xf32, #tpu.memory_space<vmem>>, vector<64x1xf32>
      tpu.vector_store %arg8[%c0_14, %c0_15], %32 {strides = array<i32>} : memref<64x1xf32, #tpu.memory_space<vmem>>, vector<64x1xf32>,
    } else {
    }
    return
  }
  func.func @transform_0(%arg0: i32, %arg1: i32) -> (i32, i32) {
    %c1_i32 = arith.constant 1 : i32
    %0 = arith.subi %c1_i32, %arg0 : i32
    %1 = arith.muli %arg1, %0 : i32
    %c0_i32 = arith.constant 0 : i32
    %c0_i32_0 = arith.constant 0 : i32
    return %1, %c0_i32 : i32, i32
  }
  func.func @transform_1(%arg0: i32, %arg1: i32) -> (i32, i32) {
    %c0_i32 = arith.constant 0 : i32
    %c0_i32_0 = arith.constant 0 : i32
    %c0_i32_1 = arith.constant 0 : i32
    return %c0_i32, %c0_i32_0 : i32, i32
  }
  func.func @transform_2(%arg0: i32, %arg1: i32) -> (i32, i32) {
    %c0_i32 = arith.constant 0 : i32
    %c0_i32_0 = arith.constant 0 : i32
    %c0_i32_1 = arith.constant 0 : i32
    return %c0_i32, %c0_i32_0 : i32, i32
  }
  func.func @transform_3(%arg0: i32, %arg1: i32) -> (i32, i32) {
    %c0_i32 = arith.constant 0 : i32
    %c0_i32_0 = arith.constant 0 : i32
    %c0_i32_1 = arith.constant 0 : i32
    return %c0_i32, %c0_i32_0 : i32, i32
  }
  func.func @transform_4(%arg0: i32, %arg1: i32) -> (i32, i32) {
    %c0_i32 = arith.constant 0 : i32
    %c0_i32_0 = arith.constant 0 : i32
    %c0_i32_1 = arith.constant 0 : i32
    return %c0_i32, %c0_i32_0 : i32, i32
  }
  func.func @transform_5(%arg0: i32, %arg1: i32) -> i32 {
    %c0_i32 = arith.constant 0 : i32
    %c0_i32_0 = arith.constant 0 : i32
    return %c0_i32 : i32
  }
  func.func @transform_6(%arg0: i32, %arg1: i32) -> (i32, i32) {
    %0 = arith.muli %arg1, %arg0 : i32
    %c0_i32 = arith.constant 0 : i32
    %c0_i32_0 = arith.constant 0 : i32
    return %0, %c0_i32 : i32, i32
  }
}

</mosaic_0001>

<llo_original>
// kernel: tpu_custom_call.1
$region0: #{tpu_custom_call.1}
  #allocation0 [shape = 'u32[]', space=smem, size = 0x4, offset = 0x4, fixed_abs, tag = 'smem constant byte address 0x4 - core index']
  #allocation1 [shape = 'u32[72,128]{1,0:T(1,128)}', space=vmem, size = 0x9000, scoped, tag = 'internal scratch']
  #allocation2 [shape = 'f32[4,64,128]{2,1,0:T(8,128)}', space=vmem, size = 0x20000, scoped, tag = 'scratch operand']
  #allocation3 [shape = 'f32[1,128]{1,0:T(1,128)}', space=vmem, size = 0x200, scoped, tag = 'scratch operand']
  #allocation4 [shape = 'f32[1,128]{1,0:T(1,128)}', space=vmem, size = 0x200, scoped, tag = 'scratch operand']
  #allocation5 [shape = 'f32[1,128]{1,0:T(1,128)}', space=vmem, size = 0x200, scoped, tag = 'scratch operand']
  #allocation6 [shape = 'f32[1,128]{1,0:T(1,128)}', space=vmem, size = 0x200, scoped, tag = 'scratch operand']
  #allocation7 [shape = 'f32[1]{0:T(128)S(6)}', space=smem, size = 0x200, scoped, tag = 'scoped memory for tpu_custom_call.1']
  %s0 = inlined_call_operand.vmem [shape: f32[256,784], index: 0, kind: input, shape index: {}]
  %s1 = inlined_call_operand.vmem [shape: f32[784,128], index: 1, kind: input, shape index: {}]
  %s2 = inlined_call_operand.vmem [shape: f32[1,128], index: 2, kind: input, shape index: {}]
  %s3 = inlined_call_operand.vmem [shape: f32[1,128], index: 3, kind: input, shape index: {}]
  %s4 = inlined_call_operand.vmem [shape: f32[1,128], index: 4, kind: input, shape index: {}]
  %s5 = inlined_call_operand.<no memory space> [shape: f32[1], index: 5, kind: input, shape index: {}]
  %s6 = inlined_call_operand.vmem [shape: f32[256,1], index: 6, kind: output, shape index: {}]
  %s7 = sld [smem:[#allocation0]]
  $region73: #{tpu_custom_call.1} parent=0
    _
  %s9 = ssub.s32 1, %s7
  %s10 = scalar_select 0, %s9, %s7
  %11 = sst [smem:[#allocation7]] %s5
  loop: start=0, step=1, limit=10
  $region2: #{tpu_custom_call.1} parent=0 // loop_pre_header
    _
  $region3: #{tpu_custom_call.1} parent=0 // loop_header
    %s13 = sphi 0, %s17
    %p14 = scmp.ge.s32.totalorder %s13, 10
    %s20 = sphi 0, %s32
    %s21 = sphi 0, %s28
    %s22 = sphi 0, %s20
    %s23 = sphi 0, %s21
    %s24 = sphi 0, %s22
    %s25 = sphi 0, %s23
    %s39 = sphi 0, %s41
    %s42 = sphi 0, %s39
    %s43 = sphi 0, %s42
    %s59 = sphi 0, %s43
    %s63 = sphi 0, %s63
    %s65 = sphi 0, %s63
    %s66 = sphi 0, %s65
    %s80 = sphi 0, %s66
    %s84 = sphi 0, %s84
    %s86 = sphi 0, %s84
    %s87 = sphi 0, %s86
    %s101 = sphi 0, %s87
    %s105 = sphi 0, %s105
    %s107 = sphi 0, %s105
    %s108 = sphi 0, %s107
    %s122 = sphi 0, %s108
    %s126 = sphi 0, %s126
    %s128 = sphi 0, %s126
    %s129 = sphi 0, %s128
    %s143 = sphi 0, %s129
    %s147 = sphi 0, %s147
    %s149 = sphi 0, %s147
    %s150 = sphi 0, %s149
    %s164 = sphi 0, %s150
    %s172 = sphi 0, %s174
    %s175 = sphi 0, %s172
    %s176 = sphi 0, %s175
    %s192 = sphi 0, %s176
  $region4: #{tpu_custom_call.1} parent=0 // loop_header_branch
    %16 = sbr.rel (%p14) target = $region8
  $region5: #{tpu_custom_call.1} parent=0 // loop_body
    %s18 = ssub.s32 %s13, 1
    %s19 = ssub.s32 %s13, 2
    %s26 = sadd.s32 1, %s21
    %p27 = scmp.ge.s32.totalorder %s26, 4
    %s28 = scalar_select %p27, 0, %s26
    %s29 = sadd.s32 1, %s20
    %s30 = scalar_select %p27, %s29, %s20
    %p31 = scmp.ge.s32.totalorder %s30, 2
    %s32 = scalar_select %p31, 0, %s30
    %s33 = ssub.s32 1, %s20
    %s34 = smul.u32 %s21, %s33
    %s35 = ssub.s32 1, %s32
    %s36 = smul.u32 %s28, %s35
    %s37 = ssub.s32 %s34, %s36
    %p38 = scmp.eq.s32.totalorder %s37, 0
    %s40 = sadd.s32 %s39, 1
    %s41 = scalar_select %p38, %s39, %s40
    %p44 = pneg %p38
    %p45 = scmp.eq.s32.totalorder %s13, 7
    %p46 = por %p44, %p45
    %p47 = scmp.ne.s32.totalorder %s39, %s42
    %p48 = scmp.eq.s32.totalorder %s13, 0
    %p49 = por %p47, %p48
    %p50 = scmp.ne.s32.totalorder %s39, %s42
    %p51 = scmp.eq.s32.totalorder %s18, 7
    %p52 = por %p50, %p51
    %p53 = scmp.ne.s32.totalorder %s42, %s43
    %p54 = scmp.eq.s32.totalorder %s18, 0
    %p55 = por %p53, %p54
    %p56 = scmp.ne.s32.totalorder %s42, %s43
    %p57 = scmp.eq.s32.totalorder %s19, 7
    %p58 = por %p56, %p57
    %p60 = scmp.ne.s32.totalorder %s43, %s59
    %p61 = scmp.eq.s32.totalorder %s19, 0
    %p62 = por %p60, %p61
    %s64 = sadd.s32 %s63, 1
    %p67 = scmp.eq.s32.totalorder %s13, 7
    %p68 = scmp.ne.s32.totalorder %s63, %s65
    %p69 = scmp.eq.s32.totalorder %s13, 0
    %p70 = por %p68, %p69
    %p71 = scmp.ne.s32.totalorder %s63, %s65
    %p72 = scmp.eq.s32.totalorder %s18, 7
    %p73 = por %p71, %p72
    %p74 = scmp.ne.s32.totalorder %s65, %s66
    %p75 = scmp.eq.s32.totalorder %s18, 0
    %p76 = por %p74, %p75
    %p77 = scmp.ne.s32.totalorder %s65, %s66
    %p78 = scmp.eq.s32.totalorder %s19, 7
    %p79 = por %p77, %p78
    %p81 = scmp.ne.s32.totalorder %s66, %s80
    %p82 = scmp.eq.s32.totalorder %s19, 0
    %p83 = por %p81, %p82
    %s85 = sadd.s32 %s84, 1
    %p88 = scmp.eq.s32.totalorder %s13, 7
    %p89 = scmp.ne.s32.totalorder %s84, %s86
    %p90 = scmp.eq.s32.totalorder %s13, 0
    %p91 = por %p89, %p90
    %p92 = scmp.ne.s32.totalorder %s84, %s86
    %p93 = scmp.eq.s32.totalorder %s18, 7
    %p94 = por %p92, %p93
    %p95 = scmp.ne.s32.totalorder %s86, %s87
    %p96 = scmp.eq.s32.totalorder %s18, 0
    %p97 = por %p95, %p96
    %p98 = scmp.ne.s32.totalorder %s86, %s87
    %p99 = scmp.eq.s32.totalorder %s19, 7
    %p100 = por %p98, %p99
    %p102 = scmp.ne.s32.totalorder %s87, %s101
    %p103 = scmp.eq.s32.totalorder %s19, 0
    %p104 = por %p102, %p103
    %s106 = sadd.s32 %s105, 1
    %p109 = scmp.eq.s32.totalorder %s13, 7
    %p110 = scmp.ne.s32.totalorder %s105, %s107
    %p111 = scmp.eq.s32.totalorder %s13, 0
    %p112 = por %p110, %p111
    %p113 = scmp.ne.s32.totalorder %s105, %s107
    %p114 = scmp.eq.s32.totalorder %s18, 7
    %p115 = por %p113, %p114
    %p116 = scmp.ne.s32.totalorder %s107, %s108
    %p117 = scmp.eq.s32.totalorder %s18, 0
    %p118 = por %p116, %p117
    %p119 = scmp.ne.s32.totalorder %s107, %s108
    %p120 = scmp.eq.s32.totalorder %s19, 7
    %p121 = por %p119, %p120
    %p123 = scmp.ne.s32.totalorder %s108, %s122
    %p124 = scmp.eq.s32.totalorder %s19, 0
    %p125 = por %p123, %p124
    %s127 = sadd.s32 %s126, 1
    %p130 = scmp.eq.s32.totalorder %s13, 7
    %p131 = scmp.ne.s32.totalorder %s126, %s128
    %p132 = scmp.eq.s32.totalorder %s13, 0
    %p133 = por %p131, %p132
    %p134 = scmp.ne.s32.totalorder %s126, %s128
    %p135 = scmp.eq.s32.totalorder %s18, 7
    %p136 = por %p134, %p135
    %p137 = scmp.ne.s32.totalorder %s128, %s129
    %p138 = scmp.eq.s32.totalorder %s18, 0
    %p139 = por %p137, %p138
    %p140 = scmp.ne.s32.totalorder %s128, %s129
    %p141 = scmp.eq.s32.totalorder %s19, 7
    %p142 = por %p140, %p141
    %p144 = scmp.ne.s32.totalorder %s129, %s143
    %p145 = scmp.eq.s32.totalorder %s19, 0
    %p146 = por %p144, %p145
    %s148 = sadd.s32 %s147, 1
    %p151 = scmp.eq.s32.totalorder %s13, 7
    %p152 = scmp.ne.s32.totalorder %s147, %s149
    %p153 = scmp.eq.s32.totalorder %s13, 0
    %p154 = por %p152, %p153
    %p155 = scmp.ne.s32.totalorder %s147, %s149
    %p156 = scmp.eq.s32.totalorder %s18, 7
    %p157 = por %p155, %p156
    %p158 = scmp.ne.s32.totalorder %s149, %s150
    %p159 = scmp.eq.s32.totalorder %s18, 0
    %p160 = por %p158, %p159
    %p161 = scmp.ne.s32.totalorder %s149, %s150
    %p162 = scmp.eq.s32.totalorder %s19, 7
    %p163 = por %p161, %p162
    %p165 = scmp.ne.s32.totalorder %s150, %s164
    %p166 = scmp.eq.s32.totalorder %s19, 0
    %p167 = por %p165, %p166
    %s168 = smul.u32 %s21, %s20
    %s169 = smul.u32 %s28, %s32
    %s170 = ssub.s32 %s168, %s169
    %p171 = scmp.eq.s32.totalorder %s170, 0
    %s173 = sadd.s32 %s172, 1
    %s174 = scalar_select %p171, %s172, %s173
    %p177 = pneg %p171
    %p178 = scmp.eq.s32.totalorder %s13, 7
    %p179 = por %p177, %p178
    %p180 = scmp.ne.s32.totalorder %s172, %s175
    %p181 = scmp.eq.s32.totalorder %s13, 0
    %p182 = por %p180, %p181
    %p183 = scmp.ne.s32.totalorder %s172, %s175
    %p184 = scmp.eq.s32.totalorder %s18, 7
    %p185 = por %p183, %p184
    %p186 = scmp.ne.s32.totalorder %s175, %s176
    %p187 = scmp.eq.s32.totalorder %s18, 0
    %p188 = por %p186, %p187
    %p189 = scmp.ne.s32.totalorder %s175, %s176
    %p190 = scmp.eq.s32.totalorder %s19, 7
    %p191 = por %p189, %p190
    %p193 = scmp.ne.s32.totalorder %s176, %s192
    %p194 = scmp.eq.s32.totalorder %s19, 0
    %p195 = por %p193, %p194
    %p196 = scmp.le.s32.totalorder 1, %s13
    %p197 = scmp.lt.s32.totalorder %s13, 9
    %p198 = pnand %p196, %p197
    %p199 = pneg %p198
    // Predicated region
    $region9: #{tpu_custom_call.1} parent=5 // pred_check
      _
    $region10: #{tpu_custom_call.1} parent=5 // pred_check_branch
      %201 = sbr.rel (%p198) target = $region12
    $region11: #{tpu_custom_call.1} parent=5 // pred_region
      %s202 = ssub.s32 %s13, 1
      // Predicated region
      $region13: #{tpu_custom_call.1} parent=11 // pred_check
        %p203 = pneg %p76
      $region14: #{tpu_custom_call.1} parent=11 // pred_check_branch
        %205 = sbr.rel (%p203) target = $region16
      $region15: #{tpu_custom_call.1} parent=11 // pred_region
        _
      $region16: #{tpu_custom_call.1} parent=11 // pred_fallthru
        _
      // Predicated region
      $region17: #{tpu_custom_call.1} parent=11 // pred_check
        %p206 = pneg %p97
      $region18: #{tpu_custom_call.1} parent=11 // pred_check_branch
        %208 = sbr.rel (%p206) target = $region20
      $region19: #{tpu_custom_call.1} parent=11 // pred_region
        _
      $region20: #{tpu_custom_call.1} parent=11 // pred_fallthru
        _
      // Predicated region
      $region21: #{tpu_custom_call.1} parent=11 // pred_check
        %p209 = pneg %p118
      $region22: #{tpu_custom_call.1} parent=11 // pred_check_branch
        %211 = sbr.rel (%p209) target = $region24
      $region23: #{tpu_custom_call.1} parent=11 // pred_region
        _
      $region24: #{tpu_custom_call.1} parent=11 // pred_fallthru
        _
      // Predicated region
      $region25: #{tpu_custom_call.1} parent=11 // pred_check
        %p212 = pneg %p139
      $region26: #{tpu_custom_call.1} parent=11 // pred_check_branch
        %214 = sbr.rel (%p212) target = $region28
      $region27: #{tpu_custom_call.1} parent=11 // pred_region
        _
      $region28: #{tpu_custom_call.1} parent=11 // pred_fallthru
        _
      // Predicated region
      $region29: #{tpu_custom_call.1} parent=11 // pred_check
        %p215 = pneg %p160
      $region30: #{tpu_custom_call.1} parent=11 // pred_check_branch
        %217 = sbr.rel (%p215) target = $region32
      $region31: #{tpu_custom_call.1} parent=11 // pred_region
        _
      $region32: #{tpu_custom_call.1} parent=11 // pred_fallthru
        _
    $region12: #{tpu_custom_call.1} parent=5 // pred_fallthru
      _
    %p218 = scmp.lt.s32.totalorder %s13, 8
    // Predicated region
    $region33: #{tpu_custom_call.1} parent=5 // pred_check
      %p219 = pneg %p218
    $region34: #{tpu_custom_call.1} parent=5 // pred_check_branch
      %221 = sbr.rel (%p219) target = $region36
    $region35: #{tpu_custom_call.1} parent=5 // pred_region
      // Predicated region
      $region37: #{tpu_custom_call.1} parent=35 // pred_check
        %p222 = pneg %p49
      $region38: #{tpu_custom_call.1} parent=35 // pred_check_branch
        %224 = sbr.rel (%p222) target = $region40
      $region39: #{tpu_custom_call.1} parent=35 // pred_region
        %s225 = ssub.s32 1, %s20
        %s226 = smul.u32 %s21, %s225
        %s227 = smul.u32 8, %s226
        %p228 = scmp.lt.s32.totalorder %s227, 31
        %s229 = scalar_select %p228, %s227, 31
        %s230 = smul.addr %s229, 7
        %s231 = smul.addr %s230, 8
        %s232 = scalar_lea.vmem %s0, %s231
        %s233 = ssub.s32 1, %s20
        %s234 = smul.u32 %s21, %s233
        %s235 = smul.u32 8, %s234
      $region40: #{tpu_custom_call.1} parent=35 // pred_fallthru
        _
    $region36: #{tpu_custom_call.1} parent=5 // pred_fallthru
      _
    %p236 = scmp.le.s32.totalorder 1, %s13
    %p237 = scmp.lt.s32.totalorder %s13, 9
    %p238 = pnand %p236, %p237
    %p239 = pneg %p238
    // Predicated region
    $region41: #{tpu_custom_call.1} parent=5 // pred_check
      _
    $region42: #{tpu_custom_call.1} parent=5 // pred_check_branch
      %241 = sbr.rel (%p238) target = $region44
    $region43: #{tpu_custom_call.1} parent=5 // pred_region
      %s242 = ssub.s32 %s13, 1
      %s243 = ssub.s32 1, %s22
      %s244 = smul.u32 %s23, %s243
      %s245 = smul.u32 8, %s244
      %p246 = scmp.lt.s32.totalorder %s245, 31
      %s247 = scalar_select %p246, %s245, 31
      %s248 = smul.addr %s247, 7
      %s249 = smul.addr %s248, 8
      %s250 = scalar_lea.vmem %s0, %s249
      %p251 = pneg %p55
      %p252 = pneg %p52
      %p253 = pneg %p76
      %p254 = pneg %p73
      %p255 = pneg %p97
      %p256 = pneg %p94
      %p257 = pneg %p118
      %p258 = pneg %p115
      %p259 = pneg %p139
      %p260 = pneg %p136
      %p261 = pneg %p160
      %p262 = pneg %p157
      %p263 = pneg %p188
      %p264 = pneg %p185
      %s265 = smul.u32 %s23, %s22
      %s266 = smul.u32 8, %s265
      %p267 = scmp.lt.s32.totalorder %s266, 31
      %s268 = scalar_select %p267, %s266, 31
      %s269 = smul.addr %s268, 8
      %s270 = scalar_lea.vmem %s6, %s269
      %s271 = ssub.s32 1, %s22
      %s272 = smul.u32 %s23, %s271
      %s273 = smul.u32 8, %s272
      %p274 = scmp.lt.s32.totalorder %s273, 31
      %s275 = scalar_select %p274, %s273, 31
      %s276 = smul.addr %s275, 7
      %s277 = smul.addr %s276, 8
      %s278 = scalar_lea.vmem %s0, %s277
      %s279 = ssub.s32 1, %s22
      %s280 = smul.u32 %s23, %s279
      %s281 = smul.u32 8, %s280
      %s282 = smul.u32 %s23, %s22
      %s283 = smul.u32 8, %s282
      %p284 = scmp.lt.s32.totalorder %s283, 31
      %s285 = scalar_select %p284, %s283, 31
      %s286 = smul.addr %s285, 8
      %s287 = scalar_lea.vmem %s6, %s286
      %s288 = smul.u32 %s23, %s22
      %s289 = smul.u32 8, %s288
      %p290 = scmp.eq.s32.totalorder %s22, 0
      // Predicated region
      $region45: #{tpu_custom_call.1} parent=43 // pred_check
        %p291 = pneg %p290
      $region46: #{tpu_custom_call.1} parent=43 // pred_check_branch
        %293 = sbr.rel (%p291) target = $region48
      $region47: #{tpu_custom_call.1} parent=43 // pred_region
        %p294 = scmp.eq.s32.totalorder %s23, 0
        // Predicated region
        $region49: #{tpu_custom_call.1} parent=47 // pred_check
          %p295 = pneg %p294
        $region50: #{tpu_custom_call.1} parent=47 // pred_check_branch
          %297 = sbr.rel (%p295) target = $region52
        $region51: #{tpu_custom_call.1} parent=47 // pred_region
          %298 = vst [vmem:[#allocation3] sm:$0x1] 0.0
          %299 = vst [vmem:[#allocation4] sm:$0x1] 0.0
        $region52: #{tpu_custom_call.1} parent=47 // pred_fallthru
          _
        %v300 = vld [vmem:[%s278] sm:$0xff]
        %v301 = vld [vmem:[%s278 + $0x8] sm:$0xff]
        %v302 = vld [vmem:[%s278 + $0x10] sm:$0xff]
        %v303 = vld [vmem:[%s278 + $0x18] sm:$0xff]
        %v304 = vld [vmem:[%s278 + $0x20] sm:$0xff]
        %v305 = vld [vmem:[%s278 + $0x28] sm:$0xff]
        %v306 = vld [vmem:[%s278 + $0x30] sm:$0xff]
        %v307 = vld [vmem:[%s278 + $0x38] sm:$0xff]
        %v308 = vld [vmem:[%s278 + $0x40] sm:$0xff]
        %v309 = vld [vmem:[%s278 + $0x48] sm:$0xff]
        %v310 = vld [vmem:[%s278 + $0x50] sm:$0xff]
        %v311 = vld [vmem:[%s278 + $0x58] sm:$0xff]
        %v312 = vld [vmem:[%s278 + $0x60] sm:$0xff]
        %v313 = vld [vmem:[%s278 + $0x68] sm:$0xff]
        %v314 = vld [vmem:[%s278 + $0x70] sm:$0xff]
        %v315 = vld [vmem:[%s278 + $0x78] sm:$0xff]
        %v316 = vld [vmem:[%s278 + $0x80] sm:$0xff]
        %v317 = vld [vmem:[%s278 + $0x88] sm:$0xff]
        %v318 = vld [vmem:[%s278 + $0x90] sm:$0xff]
        %v319 = vld [vmem:[%s278 + $0x98] sm:$0xff]
        %v320 = vld [vmem:[%s278 + $0xa0] sm:$0xff]
        %v321 = vld [vmem:[%s278 + $0xa8] sm:$0xff]
        %v322 = vld [vmem:[%s278 + $0xb0] sm:$0xff]
        %v323 = vld [vmem:[%s278 + $0xb8] sm:$0xff]
        %v324 = vld [vmem:[%s278 + $0xc0] sm:$0xff]
        %v325 = vld [vmem:[%s278 + $0xc8] sm:$0xff]
        %v326 = vld [vmem:[%s278 + $0xd0] sm:$0xff]
        %v327 = vld [vmem:[%s278 + $0xd8] sm:$0xff]
        %v328 = vld [vmem:[%s278 + $0xe0] sm:$0xff]
        %v329 = vld [vmem:[%s278 + $0xe8] sm:$0xff]
        %v330 = vld [vmem:[%s278 + $0xf0] sm:$0xff]
        %v331 = vld [vmem:[%s278 + $0xf8] sm:$0xff]
        %v332 = vld [vmem:[%s278 + $0x100] sm:$0xff]
        %v333 = vld [vmem:[%s278 + $0x108] sm:$0xff]
        %v334 = vld [vmem:[%s278 + $0x110] sm:$0xff]
        %v335 = vld [vmem:[%s278 + $0x118] sm:$0xff]
        %v336 = vld [vmem:[%s278 + $0x120] sm:$0xff]
        %v337 = vld [vmem:[%s278 + $0x128] sm:$0xff]
        %v338 = vld [vmem:[%s278 + $0x130] sm:$0xff]
        %v339 = vld [vmem:[%s278 + $0x138] sm:$0xff]
        %v340 = vld [vmem:[%s278 + $0x140] sm:$0xff]
        %v341 = vld [vmem:[%s278 + $0x148] sm:$0xff]
        %v342 = vld [vmem:[%s278 + $0x150] sm:$0xff]
        %v343 = vld [vmem:[%s278 + $0x158] sm:$0xff]
        %v344 = vld [vmem:[%s278 + $0x160] sm:$0xff]
        %v345 = vld [vmem:[%s278 + $0x168] sm:$0xff]
        %v346 = vld [vmem:[%s278 + $0x170] sm:$0xff]
        %v347 = vld [vmem:[%s278 + $0x178] sm:$0xff]
        %v348 = vld [vmem:[%s278 + $0x180] sm:$0xff]
        %v349 = vld [vmem:[%s278 + $0x188] sm:$0xff]
        %v350 = vld [vmem:[%s278 + $0x190] sm:$0xff]
        %v351 = vld [vmem:[%s278 + $0x198] sm:$0xff]
        %v352 = vld [vmem:[%s278 + $0x1a0] sm:$0xff]
        %v353 = vld [vmem:[%s278 + $0x1a8] sm:$0xff]
        %v354 = vld [vmem:[%s278 + $0x1b0] sm:$0xff]
        %v355 = vld [vmem:[%s278 + $0x1b8] sm:$0xff]
        %v356 = vld [vmem:[%s1] sm:$0xff]
        %v357 = vld [vmem:[%s1 + $0x8] sm:$0xff]
        %v358 = vld [vmem:[%s1 + $0x10] sm:$0xff]
        %v359 = vld [vmem:[%s1 + $0x18] sm:$0xff]
        %v360 = vld [vmem:[%s1 + $0x20] sm:$0xff]
        %v361 = vld [vmem:[%s1 + $0x28] sm:$0xff]
        %v362 = vld [vmem:[%s1 + $0x30] sm:$0xff]
        %v363 = vld [vmem:[%s1 + $0x38] sm:$0xff]
        %v364 = vld [vmem:[%s1 + $0x40] sm:$0xff]
        %v365 = vld [vmem:[%s1 + $0x48] sm:$0xff]
        %v366 = vld [vmem:[%s1 + $0x50] sm:$0xff]
        %v367 = vld [vmem:[%s1 + $0x58] sm:$0xff]
        %v368 = vld [vmem:[%s1 + $0x60] sm:$0xff]
        %v369 = vld [vmem:[%s1 + $0x68] sm:$0xff]
        %v370 = vld [vmem:[%s1 + $0x70] sm:$0xff]
        %v371 = vld [vmem:[%s1 + $0x78] sm:$0xff]
        %v372 = vld [vmem:[%s1 + $0x80] sm:$0xff]
        %v373 = vld [vmem:[%s1 + $0x88] sm:$0xff]
        %v374 = vld [vmem:[%s1 + $0x90] sm:$0xff]
        %v375 = vld [vmem:[%s1 + $0x98] sm:$0xff]
        %v376 = vld [vmem:[%s1 + $0xa0] sm:$0xff]
        %v377 = vld [vmem:[%s1 + $0xa8] sm:$0xff]
        %v378 = vld [vmem:[%s1 + $0xb0] sm:$0xff]
        %v379 = vld [vmem:[%s1 + $0xb8] sm:$0xff]
        %v380 = vld [vmem:[%s1 + $0xc0] sm:$0xff]
        %v381 = vld [vmem:[%s1 + $0xc8] sm:$0xff]
        %v382 = vld [vmem:[%s1 + $0xd0] sm:$0xff]
        %v383 = vld [vmem:[%s1 + $0xd8] sm:$0xff]
        %v384 = vld [vmem:[%s1 + $0xe0] sm:$0xff]
        %v385 = vld [vmem:[%s1 + $0xe8] sm:$0xff]
        %v386 = vld [vmem:[%s1 + $0xf0] sm:$0xff]
        %v387 = vld [vmem:[%s1 + $0xf8] sm:$0xff]
        %v388 = vld [vmem:[%s1 + $0x100] sm:$0xff]
        %v389 = vld [vmem:[%s1 + $0x108] sm:$0xff]
        %v390 = vld [vmem:[%s1 + $0x110] sm:$0xff]
        %v391 = vld [vmem:[%s1 + $0x118] sm:$0xff]
        %v392 = vld [vmem:[%s1 + $0x120] sm:$0xff]
        %v393 = vld [vmem:[%s1 + $0x128] sm:$0xff]
        %v394 = vld [vmem:[%s1 + $0x130] sm:$0xff]
        %v395 = vld [vmem:[%s1 + $0x138] sm:$0xff]
        %v396 = vld [vmem:[%s1 + $0x140] sm:$0xff]
        %v397 = vld [vmem:[%s1 + $0x148] sm:$0xff]
        %v398 = vld [vmem:[%s1 + $0x150] sm:$0xff]
        %v399 = vld [vmem:[%s1 + $0x158] sm:$0xff]
        %v400 = vld [vmem:[%s1 + $0x160] sm:$0xff]
        %v401 = vld [vmem:[%s1 + $0x168] sm:$0xff]
        %v402 = vld [vmem:[%s1 + $0x170] sm:$0xff]
        %v403 = vld [vmem:[%s1 + $0x178] sm:$0xff]
        %v404 = vld [vmem:[%s1 + $0x180] sm:$0xff]
        %v405 = vld [vmem:[%s1 + $0x188] sm:$0xff]
        %v406 = vld [vmem:[%s1 + $0x190] sm:$0xff]
        %v407 = vld [vmem:[%s1 + $0x198] sm:$0xff]
        %v408 = vld [vmem:[%s1 + $0x1a0] sm:$0xff]
        %v409 = vld [vmem:[%s1 + $0x1a8] sm:$0xff]
        %v410 = vld [vmem:[%s1 + $0x1b0] sm:$0xff]
        %v411 = vld [vmem:[%s1 + $0x1b8] sm:$0xff]
        %v412 = vld [vmem:[%s1 + $0x1c0] sm:$0xff]
        %v413 = vld [vmem:[%s1 + $0x1c8] sm:$0xff]
        %v414 = vld [vmem:[%s1 + $0x1d0] sm:$0xff]
        %v415 = vld [vmem:[%s1 + $0x1d8] sm:$0xff]
        %v416 = vld [vmem:[%s1 + $0x1e0] sm:$0xff]
        %v417 = vld [vmem:[%s1 + $0x1e8] sm:$0xff]
        %v418 = vld [vmem:[%s1 + $0x1f0] sm:$0xff]
        %v419 = vld [vmem:[%s1 + $0x1f8] sm:$0xff]
        %v420 = vld [vmem:[%s1 + $0x200] sm:$0xff]
        %v421 = vld [vmem:[%s1 + $0x208] sm:$0xff]
        %v422 = vld [vmem:[%s1 + $0x210] sm:$0xff]
        %v423 = vld [vmem:[%s1 + $0x218] sm:$0xff]
        %v424 = vld [vmem:[%s1 + $0x220] sm:$0xff]
        %v425 = vld [vmem:[%s1 + $0x228] sm:$0xff]
        %v426 = vld [vmem:[%s1 + $0x230] sm:$0xff]
        %v427 = vld [vmem:[%s1 + $0x238] sm:$0xff]
        %v428 = vld [vmem:[%s1 + $0x240] sm:$0xff]
        %v429 = vld [vmem:[%s1 + $0x248] sm:$0xff]
        %v430 = vld [vmem:[%s1 + $0x250] sm:$0xff]
        %v431 = vld [vmem:[%s1 + $0x258] sm:$0xff]
        %v432 = vld [vmem:[%s1 + $0x260] sm:$0xff]
        %v433 = vld [vmem:[%s1 + $0x268] sm:$0xff]
        %v434 = vld [vmem:[%s1 + $0x270] sm:$0xff]
        %v435 = vld [vmem:[%s1 + $0x278] sm:$0xff]
        %v436 = vld [vmem:[%s1 + $0x280] sm:$0xff]
        %v437 = vld [vmem:[%s1 + $0x288] sm:$0xff]
        %v438 = vld [vmem:[%s1 + $0x290] sm:$0xff]
        %v439 = vld [vmem:[%s1 + $0x298] sm:$0xff]
        %v440 = vld [vmem:[%s1 + $0x2a0] sm:$0xff]
        %v441 = vld [vmem:[%s1 + $0x2a8] sm:$0xff]
        %v442 = vld [vmem:[%s1 + $0x2b0] sm:$0xff]
        %v443 = vld [vmem:[%s1 + $0x2b8] sm:$0xff]
        %v444 = vld [vmem:[%s1 + $0x2c0] sm:$0xff]
        %v445 = vld [vmem:[%s1 + $0x2c8] sm:$0xff]
        %v446 = vld [vmem:[%s1 + $0x2d0] sm:$0xff]
        %v447 = vld [vmem:[%s1 + $0x2d8] sm:$0xff]
        %v448 = vld [vmem:[%s1 + $0x2e0] sm:$0xff]
        %v449 = vld [vmem:[%s1 + $0x2e8] sm:$0xff]
        %v450 = vld [vmem:[%s1 + $0x2f0] sm:$0xff]
        %v451 = vld [vmem:[%s1 + $0x2f8] sm:$0xff]
        %v452 = vld [vmem:[%s1 + $0x300] sm:$0xff]
        %v453 = vld [vmem:[%s1 + $0x308] sm:$0xff]
        %vm454 = vcmask 130048
        %v456 = vsel %vm454, %v306, 0
        %v459 = vsel %vm454, %v313, 0
        %v462 = vsel %vm454, %v320, 0
        %v465 = vsel %vm454, %v327, 0
        %v468 = vsel %vm454, %v334, 0
        %v471 = vsel %vm454, %v341, 0
        %v474 = vsel %vm454, %v348, 0
        %v477 = vsel %vm454, %v355, 0
        %479 = vmatpush.msra.mxu0 %v371
        %480 = vmatpush.msra.mxu0 %v370
        %481 = vmatpush.msra.mxu0 %v369
        %482 = vmatpush.msra.mxu0 %v368
        %483 = vmatpush.msra.mxu0 %v367
        %484 = vmatpush.msra.mxu0 %v366
        %485 = vmatpush.msra.mxu0 %v365
        %486 = vmatpush.msra.mxu0 %v364
        %487 = vmatpush.msra.mxu0 %v363
        %488 = vmatpush.msra.mxu0 %v362
        %489 = vmatpush.msra.mxu0 %v361
        %490 = vmatpush.msra.mxu0 %v360
        %491 = vmatpush.msra.mxu0 %v359
        %492 = vmatpush.msra.mxu0 %v358
        %493 = vmatpush.msra.mxu0 %v357
        %494 = vmatpush.msra.mxu0 %v356
        %495 = vmatmul.f32.gmra.mxu0 %v300
        %v496 = vpop.f32.mrf.mxu0
        %v497 = vadd.f32 0.0, %v496
        %498 = vmatmul.f32.gmra.mxu0 %v307
        %v499 = vpop.f32.mrf.mxu0
        %v500 = vadd.f32 0.0, %v499
        %501 = vmatmul.f32.gmra.mxu0 %v314
        %v502 = vpop.f32.mrf.mxu0
        %v503 = vadd.f32 0.0, %v502
        %504 = vmatmul.f32.gmra.mxu0 %v321
        %v505 = vpop.f32.mrf.mxu0
        %v506 = vadd.f32 0.0, %v505
        %507 = vmatmul.f32.gmra.mxu0 %v328
        %v508 = vpop.f32.mrf.mxu0
        %v509 = vadd.f32 0.0, %v508
        %510 = vmatmul.f32.gmra.mxu0 %v335
        %v511 = vpop.f32.mrf.mxu0
        %v512 = vadd.f32 0.0, %v511
        %513 = vmatmul.f32.gmra.mxu0 %v342
        %v514 = vpop.f32.mrf.mxu0
        %v515 = vadd.f32 0.0, %v514
        %516 = vmatmul.f32.gmra.mxu0 %v349
        %v517 = vpop.f32.mrf.mxu0
        %v518 = vadd.f32 0.0, %v517
        %519 = vdwg.mxu0
        %520 = vmatpush.msra.mxu0 %v387
        %521 = vmatpush.msra.mxu0 %v386
        %522 = vmatpush.msra.mxu0 %v385
        %523 = vmatpush.msra.mxu0 %v384
        %524 = vmatpush.msra.mxu0 %v383
        %525 = vmatpush.msra.mxu0 %v382
        %526 = vmatpush.msra.mxu0 %v381
        %527 = vmatpush.msra.mxu0 %v380
        %528 = vmatpush.msra.mxu0 %v379
        %529 = vmatpush.msra.mxu0 %v378
        %530 = vmatpush.msra.mxu0 %v377
        %531 = vmatpush.msra.mxu0 %v376
        %532 = vmatpush.msra.mxu0 %v375
        %533 = vmatpush.msra.mxu0 %v374
        %534 = vmatpush.msra.mxu0 %v373
        %535 = vmatpush.msra.mxu0 %v372
        %536 = vmatmul.f32.gmra.mxu0 %v301
        %v537 = vpop.f32.mrf.mxu0
        %v538 = vadd.f32 %v497, %v537
        %539 = vmatmul.f32.gmra.mxu0 %v308
        %v540 = vpop.f32.mrf.mxu0
        %v541 = vadd.f32 %v500, %v540
        %542 = vmatmul.f32.gmra.mxu0 %v315
        %v543 = vpop.f32.mrf.mxu0
        %v544 = vadd.f32 %v503, %v543
        %545 = vmatmul.f32.gmra.mxu0 %v322
        %v546 = vpop.f32.mrf.mxu0
        %v547 = vadd.f32 %v506, %v546
        %548 = vmatmul.f32.gmra.mxu0 %v329
        %v549 = vpop.f32.mrf.mxu0
        %v550 = vadd.f32 %v509, %v549
        %551 = vmatmul.f32.gmra.mxu0 %v336
        %v552 = vpop.f32.mrf.mxu0
        %v553 = vadd.f32 %v512, %v552
        %554 = vmatmul.f32.gmra.mxu0 %v343
        %v555 = vpop.f32.mrf.mxu0
        %v556 = vadd.f32 %v515, %v555
        %557 = vmatmul.f32.gmra.mxu0 %v350
        %v558 = vpop.f32.mrf.mxu0
        %v559 = vadd.f32 %v518, %v558
        %560 = vdwg.mxu0
        %561 = vmatpush.msra.mxu0 %v403
        %562 = vmatpush.msra.mxu0 %v402
        %563 = vmatpush.msra.mxu0 %v401
        %564 = vmatpush.msra.mxu0 %v400
        %565 = vmatpush.msra.mxu0 %v399
        %566 = vmatpush.msra.mxu0 %v398
        %567 = vmatpush.msra.mxu0 %v397
        %568 = vmatpush.msra.mxu0 %v396
        %569 = vmatpush.msra.mxu0 %v395
        %570 = vmatpush.msra.mxu0 %v394
        %571 = vmatpush.msra.mxu0 %v393
        %572 = vmatpush.msra.mxu0 %v392
        %573 = vmatpush.msra.mxu0 %v391
        %574 = vmatpush.msra.mxu0 %v390
        %575 = vmatpush.msra.mxu0 %v389
        %576 = vmatpush.msra.mxu0 %v388
        %577 = vmatmul.f32.gmra.mxu0 %v302
        %v578 = vpop.f32.mrf.mxu0
        %v579 = vadd.f32 %v538, %v578
        %580 = vmatmul.f32.gmra.mxu0 %v309
        %v581 = vpop.f32.mrf.mxu0
        %v582 = vadd.f32 %v541, %v581
        %583 = vmatmul.f32.gmra.mxu0 %v316
        %v584 = vpop.f32.mrf.mxu0
        %v585 = vadd.f32 %v544, %v584
        %586 = vmatmul.f32.gmra.mxu0 %v323
        %v587 = vpop.f32.mrf.mxu0
        %v588 = vadd.f32 %v547, %v587
        %589 = vmatmul.f32.gmra.mxu0 %v330
        %v590 = vpop.f32.mrf.mxu0
        %v591 = vadd.f32 %v550, %v590
        %592 = vmatmul.f32.gmra.mxu0 %v337
        %v593 = vpop.f32.mrf.mxu0
        %v594 = vadd.f32 %v553, %v593
        %595 = vmatmul.f32.gmra.mxu0 %v344
        %v596 = vpop.f32.mrf.mxu0
        %v597 = vadd.f32 %v556, %v596
        %598 = vmatmul.f32.gmra.mxu0 %v351
        %v599 = vpop.f32.mrf.mxu0
        %v600 = vadd.f32 %v559, %v599
        %601 = vdwg.mxu0
        %602 = vmatpush.msra.mxu0 %v419
        %603 = vmatpush.msra.mxu0 %v418
        %604 = vmatpush.msra.mxu0 %v417
        %605 = vmatpush.msra.mxu0 %v416
        %606 = vmatpush.msra.mxu0 %v415
        %607 = vmatpush.msra.mxu0 %v414
        %608 = vmatpush.msra.mxu0 %v413
        %609 = vmatpush.msra.mxu0 %v412
        %610 = vmatpush.msra.mxu0 %v411
        %611 = vmatpush.msra.mxu0 %v410
        %612 = vmatpush.msra.mxu0 %v409
        %613 = vmatpush.msra.mxu0 %v408
        %614 = vmatpush.msra.mxu0 %v407
        %615 = vmatpush.msra.mxu0 %v406
        %616 = vmatpush.msra.mxu0 %v405
        %617 = vmatpush.msra.mxu0 %v404
        %618 = vmatmul.f32.gmra.mxu0 %v303
        %v619 = vpop.f32.mrf.mxu0
        %v620 = vadd.f32 %v579, %v619
        %621 = vmatmul.f32.gmra.mxu0 %v310
        %v622 = vpop.f32.mrf.mxu0
        %v623 = vadd.f32 %v582, %v622
        %624 = vmatmul.f32.gmra.mxu0 %v317
        %v625 = vpop.f32.mrf.mxu0
        %v626 = vadd.f32 %v585, %v625
        %627 = vmatmul.f32.gmra.mxu0 %v324
        %v628 = vpop.f32.mrf.mxu0
        %v629 = vadd.f32 %v588, %v628
        %630 = vmatmul.f32.gmra.mxu0 %v331
        %v631 = vpop.f32.mrf.mxu0
        %v632 = vadd.f32 %v591, %v631
        %633 = vmatmul.f32.gmra.mxu0 %v338
        %v634 = vpop.f32.mrf.mxu0
        %v635 = vadd.f32 %v594, %v634
        %636 = vmatmul.f32.gmra.mxu0 %v345
        %v637 = vpop.f32.mrf.mxu0
        %v638 = vadd.f32 %v597, %v637
        %639 = vmatmul.f32.gmra.mxu0 %v352
        %v640 = vpop.f32.mrf.mxu0
        %v641 = vadd.f32 %v600, %v640
        %642 = vdwg.mxu0
        %643 = vmatpush.msra.mxu0 %v435
        %644 = vmatpush.msra.mxu0 %v434
        %645 = vmatpush.msra.mxu0 %v433
        %646 = vmatpush.msra.mxu0 %v432
        %647 = vmatpush.msra.mxu0 %v431
        %648 = vmatpush.msra.mxu0 %v430
        %649 = vmatpush.msra.mxu0 %v429
        %650 = vmatpush.msra.mxu0 %v428
        %651 = vmatpush.msra.mxu0 %v427
        %652 = vmatpush.msra.mxu0 %v426
        %653 = vmatpush.msra.mxu0 %v425
        %654 = vmatpush.msra.mxu0 %v424
        %655 = vmatpush.msra.mxu0 %v423
        %656 = vmatpush.msra.mxu0 %v422
        %657 = vmatpush.msra.mxu0 %v421
        %658 = vmatpush.msra.mxu0 %v420
        %659 = vmatmul.f32.gmra.mxu0 %v304
        %v660 = vpop.f32.mrf.mxu0
        %v661 = vadd.f32 %v620, %v660
        %662 = vmatmul.f32.gmra.mxu0 %v311
        %v663 = vpop.f32.mrf.mxu0
        %v664 = vadd.f32 %v623, %v663
        %665 = vmatmul.f32.gmra.mxu0 %v318
        %v666 = vpop.f32.mrf.mxu0
        %v667 = vadd.f32 %v626, %v666
        %668 = vmatmul.f32.gmra.mxu0 %v325
        %v669 = vpop.f32.mrf.mxu0
        %v670 = vadd.f32 %v629, %v669
        %671 = vmatmul.f32.gmra.mxu0 %v332
        %v672 = vpop.f32.mrf.mxu0
        %v673 = vadd.f32 %v632, %v672
        %674 = vmatmul.f32.gmra.mxu0 %v339
        %v675 = vpop.f32.mrf.mxu0
        %v676 = vadd.f32 %v635, %v675
        %677 = vmatmul.f32.gmra.mxu0 %v346
        %v678 = vpop.f32.mrf.mxu0
        %v679 = vadd.f32 %v638, %v678
        %680 = vmatmul.f32.gmra.mxu0 %v353
        %v681 = vpop.f32.mrf.mxu0
        %v682 = vadd.f32 %v641, %v681
        %683 = vdwg.mxu0
        %684 = vmatpush.msra.mxu0 %v451
        %685 = vmatpush.msra.mxu0 %v450
        %686 = vmatpush.msra.mxu0 %v449
        %687 = vmatpush.msra.mxu0 %v448
        %688 = vmatpush.msra.mxu0 %v447
        %689 = vmatpush.msra.mxu0 %v446
        %690 = vmatpush.msra.mxu0 %v445
        %691 = vmatpush.msra.mxu0 %v444
        %692 = vmatpush.msra.mxu0 %v443
        %693 = vmatpush.msra.mxu0 %v442
        %694 = vmatpush.msra.mxu0 %v441
        %695 = vmatpush.msra.mxu0 %v440
        %696 = vmatpush.msra.mxu0 %v439
        %697 = vmatpush.msra.mxu0 %v438
        %698 = vmatpush.msra.mxu0 %v437
        %699 = vmatpush.msra.mxu0 %v436
        %700 = vmatmul.f32.gmra.mxu0 %v305
        %v701 = vpop.f32.mrf.mxu0
        %v702 = vadd.f32 %v661, %v701
        %703 = vmatmul.f32.gmra.mxu0 %v312
        %v704 = vpop.f32.mrf.mxu0
        %v705 = vadd.f32 %v664, %v704
        %706 = vmatmul.f32.gmra.mxu0 %v319
        %v707 = vpop.f32.mrf.mxu0
        %v708 = vadd.f32 %v667, %v707
        %709 = vmatmul.f32.gmra.mxu0 %v326
        %v710 = vpop.f32.mrf.mxu0
        %v711 = vadd.f32 %v670, %v710
        %712 = vmatmul.f32.gmra.mxu0 %v333
        %v713 = vpop.f32.mrf.mxu0
        %v714 = vadd.f32 %v673, %v713
        %715 = vmatmul.f32.gmra.mxu0 %v340
        %v716 = vpop.f32.mrf.mxu0
        %v717 = vadd.f32 %v676, %v716
        %718 = vmatmul.f32.gmra.mxu0 %v347
        %v719 = vpop.f32.mrf.mxu0
        %v720 = vadd.f32 %v679, %v719
        %721 = vmatmul.f32.gmra.mxu0 %v354
        %v722 = vpop.f32.mrf.mxu0
        %v723 = vadd.f32 %v682, %v722
        %724 = vdwg.mxu0
        %725 = vmatpush.msra.mxu0 0.0
        %726 = vmatpush.msra.mxu0 0.0
        %727 = vmatpush.msra.mxu0 0.0
        %728 = vmatpush.msra.mxu0 0.0
        %729 = vmatpush.msra.mxu0 0.0
        %730 = vmatpush.msra.mxu0 0.0
        %731 = vmatpush.msra.mxu0 0.0
        %732 = vmatpush.msra.mxu0 0.0
        %733 = vmatpush.msra.mxu0 0.0
        %734 = vmatpush.msra.mxu0 0.0
        %735 = vmatpush.msra.mxu0 0.0
        %736 = vmatpush.msra.mxu0 0.0
        %737 = vmatpush.msra.mxu0 0.0
        %738 = vmatpush.msra.mxu0 0.0
        %739 = vmatpush.msra.mxu0 %v453
        %740 = vmatpush.msra.mxu0 %v452
        %741 = vmatmul.f32.gmra.mxu0 %v456
        %v742 = vpop.f32.mrf.mxu0
        %v743 = vadd.f32 %v702, %v742
        %744 = vmatmul.f32.gmra.mxu0 %v459
        %v745 = vpop.f32.mrf.mxu0
        %v746 = vadd.f32 %v705, %v745
        %747 = vmatmul.f32.gmra.mxu0 %v462
        %v748 = vpop.f32.mrf.mxu0
        %v749 = vadd.f32 %v708, %v748
        %750 = vmatmul.f32.gmra.mxu0 %v465
        %v751 = vpop.f32.mrf.mxu0
        %v752 = vadd.f32 %v711, %v751
        %753 = vmatmul.f32.gmra.mxu0 %v468
        %v754 = vpop.f32.mrf.mxu0
        %v755 = vadd.f32 %v714, %v754
        %756 = vmatmul.f32.gmra.mxu0 %v471
        %v757 = vpop.f32.mrf.mxu0
        %v758 = vadd.f32 %v717, %v757
        %759 = vmatmul.f32.gmra.mxu0 %v474
        %v760 = vpop.f32.mrf.mxu0
        %v761 = vadd.f32 %v720, %v760
        %762 = vmatmul.f32.gmra.mxu0 %v477
        %v763 = vpop.f32.mrf.mxu0
        %v764 = vadd.f32 %v723, %v763
        %765 = vdwg.mxu0
        %s766 = smul.u32 %s23, 64
        %s767 = scalar_lea.vmem [#allocation2], %s766
        %768 = vst [vmem:[%s767] sm:$0xff] %v743
        %769 = vst [vmem:[%s767 + $0x8] sm:$0xff] %v746
        %770 = vst [vmem:[%s767 + $0x10] sm:$0xff] %v749
        %771 = vst [vmem:[%s767 + $0x18] sm:$0xff] %v752
        %772 = vst [vmem:[%s767 + $0x20] sm:$0xff] %v755
        %773 = vst [vmem:[%s767 + $0x28] sm:$0xff] %v758
        %774 = vst [vmem:[%s767 + $0x30] sm:$0xff] %v761
        %775 = vst [vmem:[%s767 + $0x38] sm:$0xff] %v764
        %v776 = vld [vmem:[#allocation3] sm:$0x1]
        %v777 = vadd.f32 %v743, %v746
        %v778 = vadd.f32 %v777, %v749
        %v779 = vadd.f32 %v778, %v752
        %v780 = vadd.f32 %v779, %v755
        %v781 = vadd.f32 %v780, %v758
        %v782 = vadd.f32 %v781, %v761
        %v783 = vadd.f32 %v782, %v764
        %v784 = vrot.slane %v783, 4
        %v785 = vadd.f32 %v783, %v784
        %v786 = vrot.slane %v785, 2
        %v787 = vadd.f32 %v785, %v786
        %v788 = vrot.slane %v787, 1
        %v789 = vadd.f32 %v787, %v788
        %v790 = vadd.f32 %v776, %v789
        %791 = vst [vmem:[#allocation3] sm:$0x1] %v790
        %v792 = vld [vmem:[#allocation4] sm:$0x1]
        %v793 = vmul.f32 %v743, %v743
        %v794 = vmul.f32 %v746, %v746
        %v795 = vmul.f32 %v749, %v749
        %v796 = vmul.f32 %v752, %v752
        %v797 = vmul.f32 %v755, %v755
        %v798 = vmul.f32 %v758, %v758
        %v799 = vmul.f32 %v761, %v761
        %v800 = vmul.f32 %v764, %v764
        %v801 = vadd.f32 %v793, %v794
        %v802 = vadd.f32 %v801, %v795
        %v803 = vadd.f32 %v802, %v796
        %v804 = vadd.f32 %v803, %v797
        %v805 = vadd.f32 %v804, %v798
        %v806 = vadd.f32 %v805, %v799
        %v807 = vadd.f32 %v806, %v800
        %v808 = vrot.slane %v807, 4
        %v809 = vadd.f32 %v807, %v808
        %v810 = vrot.slane %v809, 2
        %v811 = vadd.f32 %v809, %v810
        %v812 = vrot.slane %v811, 1
        %v813 = vadd.f32 %v811, %v812
        %v814 = vadd.f32 %v792, %v813
        %815 = vst [vmem:[#allocation4] sm:$0x1] %v814
        %p816 = scmp.eq.s32.totalorder %s23, 3
        // Predicated region
        $region53: #{tpu_custom_call.1} parent=47 // pred_check
          %p817 = pneg %p816
        $region54: #{tpu_custom_call.1} parent=47 // pred_check_branch
          %819 = sbr.rel (%p817) target = $region56
        $region55: #{tpu_custom_call.1} parent=47 // pred_region
          %v820 = vld [vmem:[#allocation3] sm:$0x1]
          %v821 = vmul.f32 %v820, 0.00390625
          %v822 = vld [vmem:[#allocation4] sm:$0x1]
          %v823 = vmul.f32 %v822, 0.00390625
          %v824 = vmul.f32 %v821, %v821
          %v825 = vsub.f32 %v823, %v824
          %v826 = vadd.f32 %v825, 1e-05
          %v827 = vrsqrt.pop %v826
          %v828 = vmul.f32 %v827, %v826
          %v829 = vmul.f32 %v828, %v827
          %v830 = vmul.f32 0.5, %v829
          %v831 = vsub.f32 1.5, %v830
          %v832 = vmul.f32 %v827, %v831
          %vm833 = vweird.f32 %v826
          %vm834 = vweird.f32 %v827
          %vm835 = vmor %vm833, %vm834
          %v836 = vsel %vm835, %v827, %v832
          %v837 = vld [vmem:[%s2] sm:$0x1]
          %v838 = vmul.f32 %v837, %v836
          %839 = vst [vmem:[#allocation5] sm:$0x1] %v838
          %v840 = vld [vmem:[%s3] sm:$0x1]
          %v841 = vmul.f32 %v821, %v838
          %v842 = vsub.f32 %v840, %v841
          %843 = vst [vmem:[#allocation6] sm:$0x1] %v842
        $region56: #{tpu_custom_call.1} parent=47 // pred_fallthru
          _
      $region48: #{tpu_custom_call.1} parent=43 // pred_fallthru
        _
      %p844 = scmp.eq.s32.totalorder %s22, 1
      // Predicated region
      $region57: #{tpu_custom_call.1} parent=43 // pred_check
        %p845 = pneg %p844
      $region58: #{tpu_custom_call.1} parent=43 // pred_check_branch
        %847 = sbr.rel (%p845) target = $region60
      $region59: #{tpu_custom_call.1} parent=43 // pred_region
        %s848 = smul.u32 %s23, 64
        %s849 = scalar_lea.vmem [#allocation2], %s848
        %v850 = vld [vmem:[%s849] sm:$0xff]
        %v851 = vld [vmem:[%s849 + $0x8] sm:$0xff]
        %v852 = vld [vmem:[%s849 + $0x10] sm:$0xff]
        %v853 = vld [vmem:[%s849 + $0x18] sm:$0xff]
        %v854 = vld [vmem:[%s849 + $0x20] sm:$0xff]
        %v855 = vld [vmem:[%s849 + $0x28] sm:$0xff]
        %v856 = vld [vmem:[%s849 + $0x30] sm:$0xff]
        %v857 = vld [vmem:[%s849 + $0x38] sm:$0xff]
        %v858 = vld [vmem:[#allocation5] sm:$0x1]
        %v860 = vperm.slane %v858, 0
        %v862 = vmul.f32 %v850, %v860
        %v863 = vmul.f32 %v851, %v860
        %v864 = vmul.f32 %v852, %v860
        %v865 = vmul.f32 %v853, %v860
        %v866 = vmul.f32 %v854, %v860
        %v867 = vmul.f32 %v855, %v860
        %v868 = vmul.f32 %v856, %v860
        %v869 = vmul.f32 %v857, %v860
        %v870 = vld [vmem:[#allocation6] sm:$0x1]
        %v872 = vperm.slane %v870, 0
        %v874 = vadd.f32 %v862, %v872
        %v875 = vadd.f32 %v863, %v872
        %v876 = vadd.f32 %v864, %v872
        %v877 = vadd.f32 %v865, %v872
        %v878 = vadd.f32 %v866, %v872
        %v879 = vadd.f32 %v867, %v872
        %v880 = vadd.f32 %v868, %v872
        %v881 = vadd.f32 %v869, %v872
        %v882 = vmul.f32 %v874, 0.2
        %v883 = vmul.f32 %v875, 0.2
        %v884 = vmul.f32 %v876, 0.2
        %v885 = vmul.f32 %v877, 0.2
        %v886 = vmul.f32 %v878, 0.2
        %v887 = vmul.f32 %v879, 0.2
        %v888 = vmul.f32 %v880, 0.2
        %v889 = vmul.f32 %v881, 0.2
        %v890 = vmax.f32 %v874, %v882
        %v891 = vmax.f32 %v875, %v883
        %v892 = vmax.f32 %v876, %v884
        %v893 = vmax.f32 %v877, %v885
        %v894 = vmax.f32 %v878, %v886
        %v895 = vmax.f32 %v879, %v887
        %v896 = vmax.f32 %v880, %v888
        %v897 = vmax.f32 %v881, %v889
        %v898 = vld [vmem:[%s4] sm:$0x1]
        %v900 = vperm.slane %v898, 0
        %v902 = vmul.f32 %v890, %v900
        %v903 = vmul.f32 %v891, %v900
        %v904 = vmul.f32 %v892, %v900
        %v905 = vmul.f32 %v893, %v900
        %v906 = vmul.f32 %v894, %v900
        %v907 = vmul.f32 %v895, %v900
        %v908 = vmul.f32 %v896, %v900
        %v909 = vmul.f32 %v897, %v900
        %910 = vadd.xlane.f32.xlu0 %v902
        %v911 = vpop.xlane.xlu0 %910
        %912 = vadd.xlane.f32.xlu0 %v903
        %v913 = vpop.xlane.xlu0 %912
        %914 = vadd.xlane.f32.xlu0 %v904
        %v915 = vpop.xlane.xlu0 %914
        %916 = vadd.xlane.f32.xlu0 %v905
        %v917 = vpop.xlane.xlu0 %916
        %918 = vadd.xlane.f32.xlu0 %v906
        %v919 = vpop.xlane.xlu0 %918
        %920 = vadd.xlane.f32.xlu0 %v907
        %v921 = vpop.xlane.xlu0 %920
        %922 = vadd.xlane.f32.xlu0 %v908
        %v923 = vpop.xlane.xlu0 %922
        %924 = vadd.xlane.f32.xlu0 %v909
        %v925 = vpop.xlane.xlu0 %924
        %s926 = sld [smem:[#allocation7]]
        %v927 = vstv %s926
        %v928 = vadd.f32 %v911, %v927
        %v929 = vadd.f32 %v913, %v927
        %v930 = vadd.f32 %v915, %v927
        %v931 = vadd.f32 %v917, %v927
        %v932 = vadd.f32 %v919, %v927
        %v933 = vadd.f32 %v921, %v927
        %v934 = vadd.f32 %v923, %v927
        %v935 = vadd.f32 %v925, %v927
        %v936 = vsub.f32 0.0, %v928
        %v937 = vsub.f32 0.0, %v929
        %v938 = vsub.f32 0.0, %v930
        %v939 = vsub.f32 0.0, %v931
        %v940 = vsub.f32 0.0, %v932
        %v941 = vsub.f32 0.0, %v933
        %v942 = vsub.f32 0.0, %v934
        %v943 = vsub.f32 0.0, %v935
        %v944 = vmul.f32 %v936, 1.442695
        %v945 = vpow.pop %v944
        %v946 = vmul.f32 %v937, 1.442695
        %v947 = vpow.pop %v946
        %v948 = vmul.f32 %v938, 1.442695
        %v949 = vpow.pop %v948
        %v950 = vmul.f32 %v939, 1.442695
        %v951 = vpow.pop %v950
        %v952 = vmul.f32 %v940, 1.442695
        %v953 = vpow.pop %v952
        %v954 = vmul.f32 %v941, 1.442695
        %v955 = vpow.pop %v954
        %v956 = vmul.f32 %v942, 1.442695
        %v957 = vpow.pop %v956
        %v958 = vmul.f32 %v943, 1.442695
        %v959 = vpow.pop %v958
        %v960 = vadd.f32 %v945, 1.0
        %v961 = vadd.f32 %v947, 1.0
        %v962 = vadd.f32 %v949, 1.0
        %v963 = vadd.f32 %v951, 1.0
        %v964 = vadd.f32 %v953, 1.0
        %v965 = vadd.f32 %v955, 1.0
        %v966 = vadd.f32 %v957, 1.0
        %v967 = vadd.f32 %v959, 1.0
        %v968 = vrcp.pop %v960
        %v969 = vmul.f32 %v960, %v968
        %v970 = vsub.f32 1.0, %v969
        %v971 = vmul.f32 %v968, %v970
        %v972 = vadd.f32 %v968, %v971
        %vm973 = vweird.f32 %v960
        %vm974 = vweird.f32 %v968
        %vm975 = vmor %vm973, %vm974
        %v976 = vsel %vm975, %v968, %v972
        %v977 = vand.u32 2147483647, %v960
        %vm978 = vcmp.eq.f32.partialorder %v977, 8.507059e+37
        %v979 = vand.u32 %v960, 2147483648
        %v980 = vor.u32 1.1754944e-38, %v979
        %v981 = vsel %vm978, %v980, %v976
        %v982 = vmul.f32 1.0, %v981
        %v983 = vrcp.pop %v961
        %v984 = vmul.f32 %v961, %v983
        %v985 = vsub.f32 1.0, %v984
        %v986 = vmul.f32 %v983, %v985
        %v987 = vadd.f32 %v983, %v986
        %vm988 = vweird.f32 %v961
        %vm989 = vweird.f32 %v983
        %vm990 = vmor %vm988, %vm989
        %v991 = vsel %vm990, %v983, %v987
        %v992 = vand.u32 2147483647, %v961
        %vm993 = vcmp.eq.f32.partialorder %v992, 8.507059e+37
        %v994 = vand.u32 %v961, 2147483648
        %v995 = vor.u32 1.1754944e-38, %v994
        %v996 = vsel %vm993, %v995, %v991
        %v997 = vmul.f32 1.0, %v996
        %v998 = vrcp.pop %v962
        %v999 = vmul.f32 %v962, %v998
        %v1000 = vsub.f32 1.0, %v999
        %v1001 = vmul.f32 %v998, %v1000
        %v1002 = vadd.f32 %v998, %v1001
        %vm1003 = vweird.f32 %v962
        %vm1004 = vweird.f32 %v998
        %vm1005 = vmor %vm1003, %vm1004
        %v1006 = vsel %vm1005, %v998, %v1002
        %v1007 = vand.u32 2147483647, %v962
        %vm1008 = vcmp.eq.f32.partialorder %v1007, 8.507059e+37
        %v1009 = vand.u32 %v962, 2147483648
        %v1010 = vor.u32 1.1754944e-38, %v1009
        %v1011 = vsel %vm1008, %v1010, %v1006
        %v1012 = vmul.f32 1.0, %v1011
        %v1013 = vrcp.pop %v963
        %v1014 = vmul.f32 %v963, %v1013
        %v1015 = vsub.f32 1.0, %v1014
        %v1016 = vmul.f32 %v1013, %v1015
        %v1017 = vadd.f32 %v1013, %v1016
        %vm1018 = vweird.f32 %v963
        %vm1019 = vweird.f32 %v1013
        %vm1020 = vmor %vm1018, %vm1019
        %v1021 = vsel %vm1020, %v1013, %v1017
        %v1022 = vand.u32 2147483647, %v963
        %vm1023 = vcmp.eq.f32.partialorder %v1022, 8.507059e+37
        %v1024 = vand.u32 %v963, 2147483648
        %v1025 = vor.u32 1.1754944e-38, %v1024
        %v1026 = vsel %vm1023, %v1025, %v1021
        %v1027 = vmul.f32 1.0, %v1026
        %v1028 = vrcp.pop %v964
        %v1029 = vmul.f32 %v964, %v1028
        %v1030 = vsub.f32 1.0, %v1029
        %v1031 = vmul.f32 %v1028, %v1030
        %v1032 = vadd.f32 %v1028, %v1031
        %vm1033 = vweird.f32 %v964
        %vm1034 = vweird.f32 %v1028
        %vm1035 = vmor %vm1033, %vm1034
        %v1036 = vsel %vm1035, %v1028, %v1032
        %v1037 = vand.u32 2147483647, %v964
        %vm1038 = vcmp.eq.f32.partialorder %v1037, 8.507059e+37
        %v1039 = vand.u32 %v964, 2147483648
        %v1040 = vor.u32 1.1754944e-38, %v1039
        %v1041 = vsel %vm1038, %v1040, %v1036
        %v1042 = vmul.f32 1.0, %v1041
        %v1043 = vrcp.pop %v965
        %v1044 = vmul.f32 %v965, %v1043
        %v1045 = vsub.f32 1.0, %v1044
        %v1046 = vmul.f32 %v1043, %v1045
        %v1047 = vadd.f32 %v1043, %v1046
        %vm1048 = vweird.f32 %v965
        %vm1049 = vweird.f32 %v1043
        %vm1050 = vmor %vm1048, %vm1049
        %v1051 = vsel %vm1050, %v1043, %v1047
        %v1052 = vand.u32 2147483647, %v965
        %vm1053 = vcmp.eq.f32.partialorder %v1052, 8.507059e+37
        %v1054 = vand.u32 %v965, 2147483648
        %v1055 = vor.u32 1.1754944e-38, %v1054
        %v1056 = vsel %vm1053, %v1055, %v1051
        %v1057 = vmul.f32 1.0, %v1056
        %v1058 = vrcp.pop %v966
        %v1059 = vmul.f32 %v966, %v1058
        %v1060 = vsub.f32 1.0, %v1059
        %v1061 = vmul.f32 %v1058, %v1060
        %v1062 = vadd.f32 %v1058, %v1061
        %vm1063 = vweird.f32 %v966
        %vm1064 = vweird.f32 %v1058
        %vm1065 = vmor %vm1063, %vm1064
        %v1066 = vsel %vm1065, %v1058, %v1062
        %v1067 = vand.u32 2147483647, %v966
        %vm1068 = vcmp.eq.f32.partialorder %v1067, 8.507059e+37
        %v1069 = vand.u32 %v966, 2147483648
        %v1070 = vor.u32 1.1754944e-38, %v1069
        %v1071 = vsel %vm1068, %v1070, %v1066
        %v1072 = vmul.f32 1.0, %v1071
        %v1073 = vrcp.pop %v967
        %v1074 = vmul.f32 %v967, %v1073
        %v1075 = vsub.f32 1.0, %v1074
        %v1076 = vmul.f32 %v1073, %v1075
        %v1077 = vadd.f32 %v1073, %v1076
        %vm1078 = vweird.f32 %v967
        %vm1079 = vweird.f32 %v1073
        %vm1080 = vmor %vm1078, %vm1079
        %v1081 = vsel %vm1080, %v1073, %v1077
        %v1082 = vand.u32 2147483647, %v967
        %vm1083 = vcmp.eq.f32.partialorder %v1082, 8.507059e+37
        %v1084 = vand.u32 %v967, 2147483648
        %v1085 = vor.u32 1.1754944e-38, %v1084
        %v1086 = vsel %vm1083, %v1085, %v1081
        %v1087 = vmul.f32 1.0, %v1086
        %vm1088 = vcmask 7168
        %1089 = vst.msk [vmem:[%s287] sm:$0xff] %vm1088, %v982
        %1090 = vst.msk [vmem:[%s287 + $0x8] sm:$0xff] %vm1088, %v997
        %1091 = vst.msk [vmem:[%s287 + $0x10] sm:$0xff] %vm1088, %v1012
        %1092 = vst.msk [vmem:[%s287 + $0x18] sm:$0xff] %vm1088, %v1027
        %1093 = vst.msk [vmem:[%s287 + $0x20] sm:$0xff] %vm1088, %v1042
        %1094 = vst.msk [vmem:[%s287 + $0x28] sm:$0xff] %vm1088, %v1057
        %1095 = vst.msk [vmem:[%s287 + $0x30] sm:$0xff] %vm1088, %v1072
        %1096 = vst.msk [vmem:[%s287 + $0x38] sm:$0xff] %vm1088, %v1087
      $region60: #{tpu_custom_call.1} parent=43 // pred_fallthru
        _
      %s1097 = smul.u32 %s23, %s22
      %s1098 = smul.u32 8, %s1097
      %p1099 = scmp.lt.s32.totalorder %s1098, 31
      %s1100 = scalar_select %p1099, %s1098, 31
      %s1101 = smul.addr %s1100, 8
      %s1102 = scalar_lea.vmem %s6, %s1101
      // Predicated region
      $region61: #{tpu_custom_call.1} parent=43 // pred_check
        %p1103 = pneg %p185
      $region62: #{tpu_custom_call.1} parent=43 // pred_check_branch
        %1105 = sbr.rel (%p1103) target = $region64
      $region63: #{tpu_custom_call.1} parent=43 // pred_region
        %s1106 = smul.u32 %s23, %s22
        %s1107 = smul.u32 8, %s1106
      $region64: #{tpu_custom_call.1} parent=43 // pred_fallthru
        _
    $region44: #{tpu_custom_call.1} parent=5 // pred_fallthru
      _
    %p1108 = scmp.le.s32.totalorder 2, %s13
    // Predicated region
    $region65: #{tpu_custom_call.1} parent=5 // pred_check
      %p1109 = pneg %p1108
    $region66: #{tpu_custom_call.1} parent=5 // pred_check_branch
      %1111 = sbr.rel (%p1109) target = $region68
    $region67: #{tpu_custom_call.1} parent=5 // pred_region
      %s1112 = ssub.s32 %s13, 2
      // Predicated region
      $region69: #{tpu_custom_call.1} parent=67 // pred_check
        %p1113 = pneg %p191
      $region70: #{tpu_custom_call.1} parent=67 // pred_check_branch
        %1115 = sbr.rel (%p1113) target = $region72
      $region71: #{tpu_custom_call.1} parent=67 // pred_region
        %s1116 = smul.u32 %s25, %s24
        %s1117 = smul.u32 8, %s1116
        %p1118 = scmp.lt.s32.totalorder %s1117, 31
        %s1119 = scalar_select %p1118, %s1117, 31
        %s1120 = smul.addr %s1119, 8
        %s1121 = scalar_lea.vmem %s6, %s1120
      $region72: #{tpu_custom_call.1} parent=67 // pred_fallthru
        _
    $region68: #{tpu_custom_call.1} parent=5 // pred_fallthru
      _
  $region6: #{tpu_custom_call.1} parent=0 // loop_footer
    %s17 = sadd.s32 1, %s13
  $region7: #{tpu_custom_call.1} parent=0 // loop_footer_branch
    %12 = sbr.rel target = $region3
  $region8: #{tpu_custom_call.1} parent=0 // loop_exit
    _

</llo_original>
